<compile_context>
chip_gen: v5e
topology: v5e:2x2
jax: 0.10.0
libtpu: 0.0.40
codegen_flags: <defaults>
</compile_context>

<pallas_src>
import functools

import jax
import jax.numpy as jnp
from jax import lax
from jax.experimental import pallas as pl
from jax.experimental.pallas import tpu as pltpu


def _lstm_chunk_kernel(gx_ref, w_hh_t_ref, aux_ref, w_oh_t_ref, w_oa_t_ref,
                       b_out_ref, out_ref, h_scr, c_scr, *,
                       time_chunk, hidden, unroll):
    """One time-chunk of the recurrence per grid step.

    gx_ref     : (T, B, 4H) bf16   precomputed x @ W_ih^T + b (gates: i,f,o,g)
    w_hh_t_ref : (H, 4H)    bf16   W_hh^T (columns permuted to i,f,o,g)
    aux_ref    : (B, A)     bf16
    w_oh_t_ref : (H, O)     bf16   W_out[:, :H]^T
    w_oa_t_ref : (A, O)     bf16   W_out[:, H:]^T
    b_out_ref  : (1, O)     f32
    out_ref    : (B, O)     f32    written on the last grid step only
    h_scr/c_scr: (B, H)     f32    recurrent state carried across grid steps
    """
    H = hidden
    pid = pl.program_id(0)

    @pl.when(pid == 0)
    def _():
        h_scr[...] = jnp.zeros_like(h_scr)
        c_scr[...] = jnp.zeros_like(c_scr)

    w_hh_t = w_hh_t_ref[...]  # (H, 4H) bf16, stationary RHS across the chunk

    def step(t, carry):
        h, c = carry  # f32 state
        # Serial critical path: only the h @ W_hh^T dot (bf16 operands).
        gates = gx_ref[t].astype(jnp.float32) + jnp.dot(
            h.astype(jnp.bfloat16), w_hh_t,
            preferred_element_type=jnp.float32)            # (B, 4H) f32

        # Gate columns were permuted in the wrapper to (i, f, o, g):
        # one contiguous sigmoid over 3H lanes, one tanh over H lanes.
        sg = pl.reciprocal(1.0 + jnp.exp(-gates[:, :3 * H]), approx=True)
        g_g = jnp.tanh(gates[:, 3 * H:])
        i_g = sg[:, 0 * H:1 * H]
        f_g = sg[:, 1 * H:2 * H]
        o_g = sg[:, 2 * H:3 * H]

        c_new = f_g * c + i_g * g_g
        h_new = o_g * jnp.tanh(c_new)
        return h_new, c_new

    h, c = lax.fori_loop(0, time_chunk, step, (h_scr[...], c_scr[...]),
                         unroll=unroll)
    h_scr[...] = h
    c_scr[...] = c

    @pl.when(pid == pl.num_programs(0) - 1)
    def _():
        # Fused cat([h, aux]) @ W_out^T + b_out  (split into hidden/aux parts).
        out = (jnp.dot(h.astype(jnp.bfloat16), w_oh_t_ref[...],
                       preferred_element_type=jnp.float32)
               + jnp.dot(aux_ref[...], w_oa_t_ref[...],
                         preferred_element_type=jnp.float32)
               + b_out_ref[...])
        out_ref[...] = out.astype(out_ref.dtype)


def lstm_x1_x2_forward(primary_input, auxiliary_input, params, *,
                       time_chunk=None):
    """primary_input: (B, S, D), auxiliary_input: (B, A). Returns (B, O)."""
    w_ih, w_hh, b_ih, b_hh, w_out, b_out = (
        params["w_ih"], params["w_hh"], params["b_ih"], params["b_hh"],
        params["w_out"], params["b_out"])

    B, S, D = primary_input.shape
    H = w_hh.shape[1]
    O = w_out.shape[0]
    A = w_out.shape[1] - H

    # Pick a time-chunk that divides S (largest divisor <= requested / 8).
    if time_chunk is None:
        time_chunk = min(S, 8)
    time_chunk = max(1, min(time_chunk, S))
    while S % time_chunk:
        time_chunk -= 1
    num_chunks = S // time_chunk
    unroll = int(min(time_chunk, 8))   # bounded unroll: avoid vreg pressure

    # Permute gate columns from PyTorch order (i, f, g, o) to (i, f, o, g) so
    # the kernel can use 2 contiguous activation passes.
    perm = jnp.concatenate([jnp.arange(0, 2 * H),
                            jnp.arange(3 * H, 4 * H),
                            jnp.arange(2 * H, 3 * H)])
    w_ih_t = w_ih.T[:, perm].astype(jnp.float32)          # (D, 4H)
    w_hh_t = w_hh.T[:, perm].astype(jnp.bfloat16)         # (H, 4H)
    b_comb = (b_ih + b_hh)[perm].reshape(1, 1, 4 * H).astype(jnp.float32)

    # Hoisted input projection, done once in the wrapper; XLA's gemm absorbs
    # the (B,S,D)->(S,B,4H) layout change into its output for free.
    gx = (jnp.einsum('bsd,dg->sbg',
                     primary_input.astype(jnp.float32), w_ih_t)
          + b_comb).astype(jnp.bfloat16)                  # (S, B, 4H)

    aux = auxiliary_input.astype(jnp.bfloat16)            # (B, A)
    w_oh_t = w_out[:, :H].T.astype(jnp.bfloat16)          # (H, O)
    w_oa_t = w_out[:, H:].T.astype(jnp.bfloat16)          # (A, O)
    b_out2 = b_out.reshape(1, O).astype(jnp.float32)      # (1, O)

    kernel = functools.partial(_lstm_chunk_kernel, time_chunk=time_chunk,
                               hidden=H, unroll=unroll)

    # VMEM budget: double-buffered gx chunk + resident weights/state/output.
    gx_chunk_bytes = time_chunk * B * 4 * H * 2
    resident_bytes = (w_hh_t.size * 2 + aux.size * 2 + w_oh_t.size * 2
                      + w_oa_t.size * 2 + b_out2.size * 4
                      + B * O * 4 + 2 * B * H * 4)
    vmem_limit = int(2 * (2 * gx_chunk_bytes + resident_bytes)) + (4 << 20)

    flops = 2 * S * B * H * 4 * H + 2 * B * (H + A) * O
    transcendentals = 5 * S * B * H
    bytes_accessed = (gx.size * 2 + w_hh_t.size * 2 + aux.size * 2
                      + w_oh_t.size * 2 + w_oa_t.size * 2
                      + b_out2.size * 4 + B * O * 4)

    return pl.pallas_call(
        kernel,
        out_shape=jax.ShapeDtypeStruct((B, O), jnp.float32),
        grid_spec=pltpu.PrefetchScalarGridSpec(
            num_scalar_prefetch=0,
            grid=(num_chunks,),
            in_specs=[
                pl.BlockSpec((time_chunk, B, 4 * H), lambda s: (s, 0, 0)),
                pl.BlockSpec((H, 4 * H), lambda s: (0, 0)),
                pl.BlockSpec((B, A), lambda s: (0, 0)),
                pl.BlockSpec((H, O), lambda s: (0, 0)),
                pl.BlockSpec((A, O), lambda s: (0, 0)),
                pl.BlockSpec((1, O), lambda s: (0, 0)),
            ],
            out_specs=pl.BlockSpec((B, O), lambda s: (0, 0)),
            scratch_shapes=[pltpu.VMEM((B, H), jnp.float32),   # h state
                            pltpu.VMEM((B, H), jnp.float32)],  # c state
        ),
        compiler_params=pltpu.CompilerParams(
            dimension_semantics=("arbitrary",),   # time axis is the recurrence
            vmem_limit_bytes=vmem_limit),
        cost_estimate=pl.CostEstimate(flops=flops,
                                      transcendentals=transcendentals,
                                      bytes_accessed=bytes_accessed),
    )(gx, w_hh_t, aux, w_oh_t, w_oa_t, b_out2)


def _reference_forward(primary_input, auxiliary_input, params):
    """Pure-JAX f32 reference matching the PyTorch forward semantics."""
    w_ih, w_hh, b_ih, b_hh, w_out, b_out = (
        params["w_ih"], params["w_hh"], params["b_ih"], params["b_hh"],
        params["w_out"], params["b_out"])
    B, S, D = primary_input.shape
    H = w_hh.shape[1]
    h = jnp.zeros((B, H), jnp.float32)
    c = jnp.zeros((B, H), jnp.float32)
    for t in range(S):
        x_t = primary_input[:, t, :].astype(jnp.float32)
        gates = x_t @ w_ih.T + b_ih + h @ w_hh.T + b_hh
        i_g = jax.nn.sigmoid(gates[:, 0 * H:1 * H])
        f_g = jax.nn.sigmoid(gates[:, 1 * H:2 * H])
        g_g = jnp.tanh(gates[:, 2 * H:3 * H])
        o_g = jax.nn.sigmoid(gates[:, 3 * H:4 * H])
        c = f_g * c + i_g * g_g
        h = o_g * jnp.tanh(c)
    combined = jnp.concatenate([h, auxiliary_input.astype(jnp.float32)], axis=1)
    return combined @ w_out.T + b_out


def init_params(key, input_dim, hidden_size, output_dim, aux_dim):
    """Deterministic init mimicking PyTorch's U(-1/sqrt(H), 1/sqrt(H))."""
    ks = jax.random.split(key, 6)
    bound = 1.0 / jnp.sqrt(hidden_size)
    u = lambda k, shape: jax.random.uniform(k, shape, jnp.float32, -bound, bound)
    return {
        "w_ih": u(ks[0], (4 * hidden_size, input_dim)),
        "w_hh": u(ks[1], (4 * hidden_size, hidden_size)),
        "b_ih": u(ks[2], (4 * hidden_size,)),
        "b_hh": u(ks[3], (4 * hidden_size,)),
        "w_out": u(ks[4], (output_dim, hidden_size + aux_dim)),
        "b_out": u(ks[5], (output_dim,)),
    }


if __name__ == "__main__":
    # Small shapes consistent with the module's forward.
    B, S = 8, 8                 # batch, sequence length
    input_dim = 16
    hidden_size = 32
    output_dim = 4
    aux_dim = 8
    num_layers = 1              # forward only uses hidden_state[0] (layer 0)

    key = jax.random.PRNGKey(0)
    k_x, k_aux, k_p = jax.random.split(key, 3)

    primary_input = jax.random.normal(k_x, (B, S, input_dim), jnp.float32)
    auxiliary_input = jax.random.normal(k_aux, (B, aux_dim), jnp.float32)
    params = init_params(k_p, input_dim, hidden_size, output_dim, aux_dim)

    # time_chunk=4 -> grid=(2,): exercises the cross-chunk h/c carry + pl.when.
    out = lstm_x1_x2_forward(primary_input, auxiliary_input, params,
                             time_chunk=4)
    out = jax.block_until_ready(out)

    ref = _reference_forward(primary_input, auxiliary_input, params)
    assert out.shape == (B, output_dim), out.shape
    # bf16 MXU operands + approximate-reciprocal sigmoid -> bf16-level tolerance.
    assert jnp.allclose(out, ref, atol=2e-2, rtol=2e-2), "mismatch vs reference"

    print("KERNEL_OK")
</pallas_src>

<mosaic_0001>
module attributes {stable_mosaic.version = 11 : i64} {
  func.func @_lstm_chunk_kernel(%arg0: i32, %arg1: memref<4x8x128xbf16, #tpu.memory_space<vmem>>, %arg2: memref<32x128xbf16, #tpu.memory_space<vmem>>, %arg3: memref<8x8xbf16, #tpu.memory_space<vmem>>, %arg4: memref<32x4xbf16, #tpu.memory_space<vmem>>, %arg5: memref<8x4xbf16, #tpu.memory_space<vmem>>, %arg6: memref<1x4xf32, #tpu.memory_space<vmem>>, %arg7: memref<8x4xf32, #tpu.memory_space<vmem>>, %arg8: memref<8x32xf32, #tpu.memory_space<vmem>>, %arg9: memref<8x32xf32, #tpu.memory_space<vmem>>) attributes {dimension_semantics = [#tpu.dimension_semantics<arbitrary>], iteration_bounds = array<i64: 2>, scalar_prefetch = 0 : i64, scratch_operands = 2 : i64, tpu.core_type = #tpu.core_type<tc>, window_params = [{transform_indices = @transform_0, window_bounds = array<i64: 4, 8, 128>}, {pipeline_mode = #tpu.pipeline_mode<synchronous>, transform_indices = @transform_1, window_bounds = array<i64: 32, 128>}, {pipeline_mode = #tpu.pipeline_mode<synchronous>, transform_indices = @transform_2, window_bounds = array<i64: 8, 8>}, {pipeline_mode = #tpu.pipeline_mode<synchronous>, transform_indices = @transform_3, window_bounds = array<i64: 32, 4>}, {pipeline_mode = #tpu.pipeline_mode<synchronous>, transform_indices = @transform_4, window_bounds = array<i64: 8, 4>}, {pipeline_mode = #tpu.pipeline_mode<synchronous>, transform_indices = @transform_5, window_bounds = array<i64: 1, 4>}, {pipeline_mode = #tpu.pipeline_mode<synchronous>, transform_indices = @transform_6, window_bounds = array<i64: 8, 4>}]} {
    %c0_i32 = arith.constant 0 : i32
    %0 = arith.cmpi eq, %arg0, %c0_i32 : i32
    %1 = arith.extui %0 : i1 to i32
    %c0_i32_0 = arith.constant 0 : i32
    %2 = arith.cmpi ne, %1, %c0_i32_0 : i32
    scf.if %2 {
      %cst_32 = arith.constant 0.000000e+00 : f32
      %107 = vector.broadcast %cst_32 : f32 to vector<8x32xf32>
      %c0_33 = arith.constant 0 : index
      %c0_34 = arith.constant 0 : index
      %108 = vector.load %arg8[%c0_33, %c0_34] : memref<8x32xf32, #tpu.memory_space<vmem>>, vector<8x32xf32>
      tpu.vector_store %arg8[%c0_33, %c0_34], %107 {strides = array<i32>} : memref<8x32xf32, #tpu.memory_space<vmem>>, vector<8x32xf32>,
      %cst_35 = arith.constant 0.000000e+00 : f32
      %109 = vector.broadcast %cst_35 : f32 to vector<8x32xf32>
      %c0_36 = arith.constant 0 : index
      %c0_37 = arith.constant 0 : index
      %110 = vector.load %arg9[%c0_36, %c0_37] : memref<8x32xf32, #tpu.memory_space<vmem>>, vector<8x32xf32>
      tpu.vector_store %arg9[%c0_36, %c0_37], %109 {strides = array<i32>} : memref<8x32xf32, #tpu.memory_space<vmem>>, vector<8x32xf32>,
    } else {
    }
    %c0 = arith.constant 0 : index
    %c0_1 = arith.constant 0 : index
    %3 = vector.load %arg2[%c0, %c0_1] : memref<32x128xbf16, #tpu.memory_space<vmem>>, vector<32x128xbf16>
    %c0_2 = arith.constant 0 : index
    %c0_3 = arith.constant 0 : index
    %4 = vector.load %arg8[%c0_2, %c0_3] : memref<8x32xf32, #tpu.memory_space<vmem>>, vector<8x32xf32>
    %c0_4 = arith.constant 0 : index
    %c0_5 = arith.constant 0 : index
    %5 = vector.load %arg9[%c0_4, %c0_5] : memref<8x32xf32, #tpu.memory_space<vmem>>, vector<8x32xf32>
    %c0_i32_6 = arith.constant 0 : i32
    %6 = arith.index_cast %c0_i32_6 : i32 to index
    %c0_7 = arith.constant 0 : index
    %c0_8 = arith.constant 0 : index
    %7 = vector.load %arg1[%6, %c0_7, %c0_8] : memref<4x8x128xbf16, #tpu.memory_space<vmem>>, vector<1x8x128xbf16>
    %8 = vector.shape_cast %7 : vector<1x8x128xbf16> to vector<8x128xbf16>
    %9 = arith.extf %8 : vector<8x128xbf16> to vector<8x128xf32>
    %10 = arith.truncf %4 : vector<8x32xf32> to vector<8x32xbf16>
    %cst = arith.constant dense<0.000000e+00> : vector<8x128xf32>
    %11 = tpu.matmul %10, %3, %cst {dimension_numbers = #tpu.dot_dimension_numbers<[1], [0], [0], [1], [0, 0, 1, 1], [], []>} : vector<8x32xbf16>, vector<32x128xbf16>, vector<8x128xf32> -> vector<8x128xf32>
    %12 = arith.addf %9, %11 : vector<8x128xf32>
    %13 = vector.extract_strided_slice %12 {offsets = [0, 0], sizes = [8, 96], strides = [1, 1]} : vector<8x128xf32> to vector<8x96xf32>
    %cst_9 = arith.constant 0.000000e+00 : f32
    %14 = vector.broadcast %cst_9 : f32 to vector<8x96xf32>
    %15 = arith.subf %14, %13 : vector<8x96xf32>
    %16 = math.exp %15 : vector<8x96xf32>
    %cst_10 = arith.constant 1.000000e+00 : f32
    %17 = vector.broadcast %cst_10 : f32 to vector<8x96xf32>
    %18 = arith.addf %17, %16 : vector<8x96xf32>
    %19 = tpu.reciprocal %18 {approx = true} : vector<8x96xf32> -> vector<8x96xf32>
    %20 = vector.extract_strided_slice %12 {offsets = [0, 96], sizes = [8, 32], strides = [1, 1]} : vector<8x128xf32> to vector<8x32xf32>
    %21 = math.tanh %20 : vector<8x32xf32>
    %22 = vector.extract_strided_slice %19 {offsets = [0, 0], sizes = [8, 32], strides = [1, 1]} : vector<8x96xf32> to vector<8x32xf32>
    %23 = vector.extract_strided_slice %19 {offsets = [0, 32], sizes = [8, 32], strides = [1, 1]} : vector<8x96xf32> to vector<8x32xf32>
    %24 = vector.extract_strided_slice %19 {offsets = [0, 64], sizes = [8, 32], strides = [1, 1]} : vector<8x96xf32> to vector<8x32xf32>
    %25 = arith.mulf %23, %5 : vector<8x32xf32>
    %26 = arith.mulf %22, %21 : vector<8x32xf32>
    %27 = arith.addf %25, %26 : vector<8x32xf32>
    %28 = math.tanh %27 : vector<8x32xf32>
    %29 = arith.mulf %24, %28 : vector<8x32xf32>
    %c1_i32 = arith.constant 1 : i32
    %30 = arith.index_cast %c1_i32 : i32 to index
    %c0_11 = arith.constant 0 : index
    %c0_12 = arith.constant 0 : index
    %31 = vector.load %arg1[%30, %c0_11, %c0_12] : memref<4x8x128xbf16, #tpu.memory_space<vmem>>, vector<1x8x128xbf16>
    %32 = vector.shape_cast %31 : vector<1x8x128xbf16> to vector<8x128xbf16>
    %33 = arith.extf %32 : vector<8x128xbf16> to vector<8x128xf32>
    %34 = arith.truncf %29 : vector<8x32xf32> to vector<8x32xbf16>
    %cst_13 = arith.constant dense<0.000000e+00> : vector<8x128xf32>
    %35 = tpu.matmul %34, %3, %cst_13 {dimension_numbers = #tpu.dot_dimension_numbers<[1], [0], [0], [1], [0, 0, 1, 1], [], []>} : vector<8x32xbf16>, vector<32x128xbf16>, vector<8x128xf32> -> vector<8x128xf32>
    %36 = arith.addf %33, %35 : vector<8x128xf32>
    %37 = vector.extract_strided_slice %36 {offsets = [0, 0], sizes = [8, 96], strides = [1, 1]} : vector<8x128xf32> to vector<8x96xf32>
    %cst_14 = arith.constant 0.000000e+00 : f32
    %38 = vector.broadcast %cst_14 : f32 to vector<8x96xf32>
    %39 = arith.subf %38, %37 : vector<8x96xf32>
    %40 = math.exp %39 : vector<8x96xf32>
    %cst_15 = arith.constant 1.000000e+00 : f32
    %41 = vector.broadcast %cst_15 : f32 to vector<8x96xf32>
    %42 = arith.addf %41, %40 : vector<8x96xf32>
    %43 = tpu.reciprocal %42 {approx = true} : vector<8x96xf32> -> vector<8x96xf32>
    %44 = vector.extract_strided_slice %36 {offsets = [0, 96], sizes = [8, 32], strides = [1, 1]} : vector<8x128xf32> to vector<8x32xf32>
    %45 = math.tanh %44 : vector<8x32xf32>
    %46 = vector.extract_strided_slice %43 {offsets = [0, 0], sizes = [8, 32], strides = [1, 1]} : vector<8x96xf32> to vector<8x32xf32>
    %47 = vector.extract_strided_slice %43 {offsets = [0, 32], sizes = [8, 32], strides = [1, 1]} : vector<8x96xf32> to vector<8x32xf32>
    %48 = vector.extract_strided_slice %43 {offsets = [0, 64], sizes = [8, 32], strides = [1, 1]} : vector<8x96xf32> to vector<8x32xf32>
    %49 = arith.mulf %47, %27 : vector<8x32xf32>
    %50 = arith.mulf %46, %45 : vector<8x32xf32>
    %51 = arith.addf %49, %50 : vector<8x32xf32>
    %52 = math.tanh %51 : vector<8x32xf32>
    %53 = arith.mulf %48, %52 : vector<8x32xf32>
    %c2_i32 = arith.constant 2 : i32
    %54 = arith.index_cast %c2_i32 : i32 to index
    %c0_16 = arith.constant 0 : index
    %c0_17 = arith.constant 0 : index
    %55 = vector.load %arg1[%54, %c0_16, %c0_17] : memref<4x8x128xbf16, #tpu.memory_space<vmem>>, vector<1x8x128xbf16>
    %56 = vector.shape_cast %55 : vector<1x8x128xbf16> to vector<8x128xbf16>
    %57 = arith.extf %56 : vector<8x128xbf16> to vector<8x128xf32>
    %58 = arith.truncf %53 : vector<8x32xf32> to vector<8x32xbf16>
    %cst_18 = arith.constant dense<0.000000e+00> : vector<8x128xf32>
    %59 = tpu.matmul %58, %3, %cst_18 {dimension_numbers = #tpu.dot_dimension_numbers<[1], [0], [0], [1], [0, 0, 1, 1], [], []>} : vector<8x32xbf16>, vector<32x128xbf16>, vector<8x128xf32> -> vector<8x128xf32>
    %60 = arith.addf %57, %59 : vector<8x128xf32>
    %61 = vector.extract_strided_slice %60 {offsets = [0, 0], sizes = [8, 96], strides = [1, 1]} : vector<8x128xf32> to vector<8x96xf32>
    %cst_19 = arith.constant 0.000000e+00 : f32
    %62 = vector.broadcast %cst_19 : f32 to vector<8x96xf32>
    %63 = arith.subf %62, %61 : vector<8x96xf32>
    %64 = math.exp %63 : vector<8x96xf32>
    %cst_20 = arith.constant 1.000000e+00 : f32
    %65 = vector.broadcast %cst_20 : f32 to vector<8x96xf32>
    %66 = arith.addf %65, %64 : vector<8x96xf32>
    %67 = tpu.reciprocal %66 {approx = true} : vector<8x96xf32> -> vector<8x96xf32>
    %68 = vector.extract_strided_slice %60 {offsets = [0, 96], sizes = [8, 32], strides = [1, 1]} : vector<8x128xf32> to vector<8x32xf32>
    %69 = math.tanh %68 : vector<8x32xf32>
    %70 = vector.extract_strided_slice %67 {offsets = [0, 0], sizes = [8, 32], strides = [1, 1]} : vector<8x96xf32> to vector<8x32xf32>
    %71 = vector.extract_strided_slice %67 {offsets = [0, 32], sizes = [8, 32], strides = [1, 1]} : vector<8x96xf32> to vector<8x32xf32>
    %72 = vector.extract_strided_slice %67 {offsets = [0, 64], sizes = [8, 32], strides = [1, 1]} : vector<8x96xf32> to vector<8x32xf32>
    %73 = arith.mulf %71, %51 : vector<8x32xf32>
    %74 = arith.mulf %70, %69 : vector<8x32xf32>
    %75 = arith.addf %73, %74 : vector<8x32xf32>
    %76 = math.tanh %75 : vector<8x32xf32>
    %77 = arith.mulf %72, %76 : vector<8x32xf32>
    %c3_i32 = arith.constant 3 : i32
    %78 = arith.index_cast %c3_i32 : i32 to index
    %c0_21 = arith.constant 0 : index
    %c0_22 = arith.constant 0 : index
    %79 = vector.load %arg1[%78, %c0_21, %c0_22] : memref<4x8x128xbf16, #tpu.memory_space<vmem>>, vector<1x8x128xbf16>
    %80 = vector.shape_cast %79 : vector<1x8x128xbf16> to vector<8x128xbf16>
    %81 = arith.extf %80 : vector<8x128xbf16> to vector<8x128xf32>
    %82 = arith.truncf %77 : vector<8x32xf32> to vector<8x32xbf16>
    %cst_23 = arith.constant dense<0.000000e+00> : vector<8x128xf32>
    %83 = tpu.matmul %82, %3, %cst_23 {dimension_numbers = #tpu.dot_dimension_numbers<[1], [0], [0], [1], [0, 0, 1, 1], [], []>} : vector<8x32xbf16>, vector<32x128xbf16>, vector<8x128xf32> -> vector<8x128xf32>
    %84 = arith.addf %81, %83 : vector<8x128xf32>
    %85 = vector.extract_strided_slice %84 {offsets = [0, 0], sizes = [8, 96], strides = [1, 1]} : vector<8x128xf32> to vector<8x96xf32>
    %cst_24 = arith.constant 0.000000e+00 : f32
    %86 = vector.broadcast %cst_24 : f32 to vector<8x96xf32>
    %87 = arith.subf %86, %85 : vector<8x96xf32>
    %88 = math.exp %87 : vector<8x96xf32>
    %cst_25 = arith.constant 1.000000e+00 : f32
    %89 = vector.broadcast %cst_25 : f32 to vector<8x96xf32>
    %90 = arith.addf %89, %88 : vector<8x96xf32>
    %91 = tpu.reciprocal %90 {approx = true} : vector<8x96xf32> -> vector<8x96xf32>
    %92 = vector.extract_strided_slice %84 {offsets = [0, 96], sizes = [8, 32], strides = [1, 1]} : vector<8x128xf32> to vector<8x32xf32>
    %93 = math.tanh %92 : vector<8x32xf32>
    %94 = vector.extract_strided_slice %91 {offsets = [0, 0], sizes = [8, 32], strides = [1, 1]} : vector<8x96xf32> to vector<8x32xf32>
    %95 = vector.extract_strided_slice %91 {offsets = [0, 32], sizes = [8, 32], strides = [1, 1]} : vector<8x96xf32> to vector<8x32xf32>
    %96 = vector.extract_strided_slice %91 {offsets = [0, 64], sizes = [8, 32], strides = [1, 1]} : vector<8x96xf32> to vector<8x32xf32>
    %97 = arith.mulf %95, %75 : vector<8x32xf32>
    %98 = arith.mulf %94, %93 : vector<8x32xf32>
    %99 = arith.addf %97, %98 : vector<8x32xf32>
    %100 = math.tanh %99 : vector<8x32xf32>
    %101 = arith.mulf %96, %100 : vector<8x32xf32>
    %c4_i32 = arith.constant 4 : i32
    %c0_26 = arith.constant 0 : index
    %c0_27 = arith.constant 0 : index
    %102 = vector.load %arg8[%c0_26, %c0_27] : memref<8x32xf32, #tpu.memory_space<vmem>>, vector<8x32xf32>
    tpu.vector_store %arg8[%c0_26, %c0_27], %101 {strides = array<i32>} : memref<8x32xf32, #tpu.memory_space<vmem>>, vector<8x32xf32>,
    %c0_28 = arith.constant 0 : index
    %c0_29 = arith.constant 0 : index
    %103 = vector.load %arg9[%c0_28, %c0_29] : memref<8x32xf32, #tpu.memory_space<vmem>>, vector<8x32xf32>
    tpu.vector_store %arg9[%c0_28, %c0_29], %99 {strides = array<i32>} : memref<8x32xf32, #tpu.memory_space<vmem>>, vector<8x32xf32>,
    %c1_i32_30 = arith.constant 1 : i32
    %104 = arith.cmpi eq, %arg0, %c1_i32_30 : i32
    %105 = arith.extui %104 : i1 to i32
    %c0_i32_31 = arith.constant 0 : i32
    %106 = arith.cmpi ne, %105, %c0_i32_31 : i32
    scf.if %106 {
      %107 = arith.truncf %101 : vector<8x32xf32> to vector<8x32xbf16>
      %c0_32 = arith.constant 0 : index
      %c0_33 = arith.constant 0 : index
      %108 = vector.load %arg4[%c0_32, %c0_33] : memref<32x4xbf16, #tpu.memory_space<vmem>>, vector<32x4xbf16>
      %cst_34 = arith.constant dense<0.000000e+00> : vector<8x4xf32>
      %109 = tpu.matmul %107, %108, %cst_34 {dimension_numbers = #tpu.dot_dimension_numbers<[1], [0], [0], [1], [0, 0, 1, 1], [], []>} : vector<8x32xbf16>, vector<32x4xbf16>, vector<8x4xf32> -> vector<8x4xf32>
      %c0_35 = arith.constant 0 : index
      %c0_36 = arith.constant 0 : index
      %110 = vector.load %arg3[%c0_35, %c0_36] : memref<8x8xbf16, #tpu.memory_space<vmem>>, vector<8x8xbf16>
      %c0_37 = arith.constant 0 : index
      %c0_38 = arith.constant 0 : index
      %111 = vector.load %arg5[%c0_37, %c0_38] : memref<8x4xbf16, #tpu.memory_space<vmem>>, vector<8x4xbf16>
      %cst_39 = arith.constant dense<0.000000e+00> : vector<8x4xf32>
      %112 = tpu.matmul %110, %111, %cst_39 {dimension_numbers = #tpu.dot_dimension_numbers<[1], [0], [0], [1], [0, 0, 1, 1], [], []>} : vector<8x8xbf16>, vector<8x4xbf16>, vector<8x4xf32> -> vector<8x4xf32>
      %113 = arith.addf %109, %112 : vector<8x4xf32>
      %c0_40 = arith.constant 0 : index
      %c0_41 = arith.constant 0 : index
      %114 = vector.load %arg6[%c0_40, %c0_41] : memref<1x4xf32, #tpu.memory_space<vmem>>, vector<1x4xf32>
      %115 = vector.broadcast %114 : vector<1x4xf32> to vector<8x4xf32>
      %116 = arith.addf %113, %115 : vector<8x4xf32>
      %c0_42 = arith.constant 0 : index
      %c0_43 = arith.constant 0 : index
      %117 = vector.load %arg7[%c0_42, %c0_43] : memref<8x4xf32, #tpu.memory_space<vmem>>, vector<8x4xf32>
      tpu.vector_store %arg7[%c0_42, %c0_43], %116 {strides = array<i32>} : memref<8x4xf32, #tpu.memory_space<vmem>>, vector<8x4xf32>,
    } else {
    }
    return
  }
  func.func @transform_0(%arg0: i32) -> (i32, i32, i32) {
    %c0_i32 = arith.constant 0 : i32
    %c0_i32_0 = arith.constant 0 : i32
    %c0_i32_1 = arith.constant 0 : i32
    return %arg0, %c0_i32, %c0_i32_0 : i32, i32, i32
  }
  func.func @transform_1(%arg0: i32) -> (i32, i32) {
    %c0_i32 = arith.constant 0 : i32
    %c0_i32_0 = arith.constant 0 : i32
    %c0_i32_1 = arith.constant 0 : i32
    return %c0_i32, %c0_i32_0 : i32, i32
  }
  func.func @transform_2(%arg0: i32) -> (i32, i32) {
    %c0_i32 = arith.constant 0 : i32
    %c0_i32_0 = arith.constant 0 : i32
    %c0_i32_1 = arith.constant 0 : i32
    return %c0_i32, %c0_i32_0 : i32, i32
  }
  func.func @transform_3(%arg0: i32) -> (i32, i32) {
    %c0_i32 = arith.constant 0 : i32
    %c0_i32_0 = arith.constant 0 : i32
    %c0_i32_1 = arith.constant 0 : i32
    return %c0_i32, %c0_i32_0 : i32, i32
  }
  func.func @transform_4(%arg0: i32) -> (i32, i32) {
    %c0_i32 = arith.constant 0 : i32
    %c0_i32_0 = arith.constant 0 : i32
    %c0_i32_1 = arith.constant 0 : i32
    return %c0_i32, %c0_i32_0 : i32, i32
  }
  func.func @transform_5(%arg0: i32) -> (i32, i32) {
    %c0_i32 = arith.constant 0 : i32
    %c0_i32_0 = arith.constant 0 : i32
    %c0_i32_1 = arith.constant 0 : i32
    return %c0_i32, %c0_i32_0 : i32, i32
  }
  func.func @transform_6(%arg0: i32) -> (i32, i32) {
    %c0_i32 = arith.constant 0 : i32
    %c0_i32_0 = arith.constant 0 : i32
    %c0_i32_1 = arith.constant 0 : i32
    return %c0_i32, %c0_i32_0 : i32, i32
  }
}

</mosaic_0001>

<llo_original>
// kernel: tpu_custom_call.1
$region0: #{tpu_custom_call.1}
  #allocation0 [shape = 'u32[]', space=smem, size = 0x4, offset = 0x4, fixed_abs, tag = 'smem constant byte address 0x4 - core index']
  #allocation1 [shape = 'u32[72,128]{1,0:T(1,128)}', space=vmem, size = 0x9000, scoped, tag = 'internal scratch']
  #allocation2 [shape = 'f32[8,32]{1,0:T(8,128)}', space=vmem, size = 0x1000, scoped, tag = 'scratch operand']
  #allocation3 [shape = 'f32[8,32]{1,0:T(8,128)}', space=vmem, size = 0x1000, scoped, tag = 'scratch operand']
  %s0 = inlined_call_operand.hbm [shape: bf16[8,8,128], index: 0, kind: input, shape index: {}]
  %s1 = inlined_call_operand.vmem [shape: bf16[32,128], index: 1, kind: input, shape index: {}]
  %s2 = inlined_call_operand.vmem [shape: bf16[8,8], index: 2, kind: input, shape index: {}]
  %s3 = inlined_call_operand.vmem [shape: bf16[32,4], index: 3, kind: input, shape index: {}]
  %s4 = inlined_call_operand.vmem [shape: bf16[8,4], index: 4, kind: input, shape index: {}]
  %s5 = inlined_call_operand.vmem [shape: f32[1,4], index: 5, kind: input, shape index: {}]
  %s6 = inlined_call_operand.vmem [shape: f32[8,4], index: 6, kind: output, shape index: {}]
  %s7 = sld [smem:[#allocation0]]
  $region69: #{tpu_custom_call.1} parent=0
    _
  %s9 = ssub.s32 1, %s7
  %s10 = scalar_select 0, %s9, %s7
  $region1: #{tpu_custom_call.1} parent=0
    #allocation4 [shape = 'u8[16384]{0}', space=vmem, size = 0x4000, scoped, tag = 'input window, operand 0']
    #allocation5 [shape = 's32[2]{0}', space=sflag, size = 0x8, scoped, tag = 'scoped memory for tpu_custom_call.1']
    %11 = vsyncpa [#allocation5], 0
    %s12 = scalar_lea.sflag [#allocation5], 1
    %13 = vsyncpa %s12, 0
    loop: start=0, step=1, limit=4
    $region2: #{tpu_custom_call.1} parent=1 // loop_pre_header
      _
    $region3: #{tpu_custom_call.1} parent=1 // loop_header
      %s15 = sphi 0, %s19
      %p16 = scmp.ge.s32.totalorder %s15, 4
      %s25 = sphi 0, %s27
      %s28 = sphi 0, %s25
      %s29 = sphi 0, %s28
      %s45 = sphi 0, %s29
      %s49 = sphi 0, %s49
      %s51 = sphi 0, %s49
      %s52 = sphi 0, %s51
      %s66 = sphi 0, %s52
      %s70 = sphi 0, %s70
      %s72 = sphi 0, %s70
      %s73 = sphi 0, %s72
      %s87 = sphi 0, %s73
      %s91 = sphi 0, %s91
      %s93 = sphi 0, %s91
      %s94 = sphi 0, %s93
      %s108 = sphi 0, %s94
      %s112 = sphi 0, %s112
      %s114 = sphi 0, %s112
      %s115 = sphi 0, %s114
      %s129 = sphi 0, %s115
      %s133 = sphi 0, %s133
      %s135 = sphi 0, %s133
      %s136 = sphi 0, %s135
      %s150 = sphi 0, %s136
      %s154 = sphi 0, %s154
      %s156 = sphi 0, %s154
      %s157 = sphi 0, %s156
      %s171 = sphi 0, %s157
    $region4: #{tpu_custom_call.1} parent=1 // loop_header_branch
      %18 = sbr.rel (%p16) target = $region8
    $region5: #{tpu_custom_call.1} parent=1 // loop_body
      %s20 = ssub.s32 %s15, 1
      %s21 = ssub.s32 %s15, 2
      %s22 = sadd.s32 %s15, 1
      %s23 = ssub.s32 %s15, %s22
      %p24 = scmp.eq.s32.totalorder %s23, 0
      %s26 = sadd.s32 %s25, 1
      %s27 = scalar_select %p24, %s25, %s26
      %p30 = pneg %p24
      %p31 = scmp.eq.s32.totalorder %s15, 1
      %p32 = por %p30, %p31
      %p33 = scmp.ne.s32.totalorder %s25, %s28
      %p34 = scmp.eq.s32.totalorder %s15, 0
      %p35 = por %p33, %p34
      %p36 = scmp.ne.s32.totalorder %s25, %s28
      %p37 = scmp.eq.s32.totalorder %s20, 1
      %p38 = por %p36, %p37
      %p39 = scmp.ne.s32.totalorder %s28, %s29
      %p40 = scmp.eq.s32.totalorder %s20, 0
      %p41 = por %p39, %p40
      %p42 = scmp.ne.s32.totalorder %s28, %s29
      %p43 = scmp.eq.s32.totalorder %s21, 1
      %p44 = por %p42, %p43
      %p46 = scmp.ne.s32.totalorder %s29, %s45
      %p47 = scmp.eq.s32.totalorder %s21, 0
      %p48 = por %p46, %p47
      %s50 = sadd.s32 %s49, 1
      %p53 = scmp.eq.s32.totalorder %s15, 1
      %p54 = scmp.ne.s32.totalorder %s49, %s51
      %p55 = scmp.eq.s32.totalorder %s15, 0
      %p56 = por %p54, %p55
      %p57 = scmp.ne.s32.totalorder %s49, %s51
      %p58 = scmp.eq.s32.totalorder %s20, 1
      %p59 = por %p57, %p58
      %p60 = scmp.ne.s32.totalorder %s51, %s52
      %p61 = scmp.eq.s32.totalorder %s20, 0
      %p62 = por %p60, %p61
      %p63 = scmp.ne.s32.totalorder %s51, %s52
      %p64 = scmp.eq.s32.totalorder %s21, 1
      %p65 = por %p63, %p64
      %p67 = scmp.ne.s32.totalorder %s52, %s66
      %p68 = scmp.eq.s32.totalorder %s21, 0
      %p69 = por %p67, %p68
      %s71 = sadd.s32 %s70, 1
      %p74 = scmp.eq.s32.totalorder %s15, 1
      %p75 = scmp.ne.s32.totalorder %s70, %s72
      %p76 = scmp.eq.s32.totalorder %s15, 0
      %p77 = por %p75, %p76
      %p78 = scmp.ne.s32.totalorder %s70, %s72
      %p79 = scmp.eq.s32.totalorder %s20, 1
      %p80 = por %p78, %p79
      %p81 = scmp.ne.s32.totalorder %s72, %s73
      %p82 = scmp.eq.s32.totalorder %s20, 0
      %p83 = por %p81, %p82
      %p84 = scmp.ne.s32.totalorder %s72, %s73
      %p85 = scmp.eq.s32.totalorder %s21, 1
      %p86 = por %p84, %p85
      %p88 = scmp.ne.s32.totalorder %s73, %s87
      %p89 = scmp.eq.s32.totalorder %s21, 0
      %p90 = por %p88, %p89
      %s92 = sadd.s32 %s91, 1
      %p95 = scmp.eq.s32.totalorder %s15, 1
      %p96 = scmp.ne.s32.totalorder %s91, %s93
      %p97 = scmp.eq.s32.totalorder %s15, 0
      %p98 = por %p96, %p97
      %p99 = scmp.ne.s32.totalorder %s91, %s93
      %p100 = scmp.eq.s32.totalorder %s20, 1
      %p101 = por %p99, %p100
      %p102 = scmp.ne.s32.totalorder %s93, %s94
      %p103 = scmp.eq.s32.totalorder %s20, 0
      %p104 = por %p102, %p103
      %p105 = scmp.ne.s32.totalorder %s93, %s94
      %p106 = scmp.eq.s32.totalorder %s21, 1
      %p107 = por %p105, %p106
      %p109 = scmp.ne.s32.totalorder %s94, %s108
      %p110 = scmp.eq.s32.totalorder %s21, 0
      %p111 = por %p109, %p110
      %s113 = sadd.s32 %s112, 1
      %p116 = scmp.eq.s32.totalorder %s15, 1
      %p117 = scmp.ne.s32.totalorder %s112, %s114
      %p118 = scmp.eq.s32.totalorder %s15, 0
      %p119 = por %p117, %p118
      %p120 = scmp.ne.s32.totalorder %s112, %s114
      %p121 = scmp.eq.s32.totalorder %s20, 1
      %p122 = por %p120, %p121
      %p123 = scmp.ne.s32.totalorder %s114, %s115
      %p124 = scmp.eq.s32.totalorder %s20, 0
      %p125 = por %p123, %p124
      %p126 = scmp.ne.s32.totalorder %s114, %s115
      %p127 = scmp.eq.s32.totalorder %s21, 1
      %p128 = por %p126, %p127
      %p130 = scmp.ne.s32.totalorder %s115, %s129
      %p131 = scmp.eq.s32.totalorder %s21, 0
      %p132 = por %p130, %p131
      %s134 = sadd.s32 %s133, 1
      %p137 = scmp.eq.s32.totalorder %s15, 1
      %p138 = scmp.ne.s32.totalorder %s133, %s135
      %p139 = scmp.eq.s32.totalorder %s15, 0
      %p140 = por %p138, %p139
      %p141 = scmp.ne.s32.totalorder %s133, %s135
      %p142 = scmp.eq.s32.totalorder %s20, 1
      %p143 = por %p141, %p142
      %p144 = scmp.ne.s32.totalorder %s135, %s136
      %p145 = scmp.eq.s32.totalorder %s20, 0
      %p146 = por %p144, %p145
      %p147 = scmp.ne.s32.totalorder %s135, %s136
      %p148 = scmp.eq.s32.totalorder %s21, 1
      %p149 = por %p147, %p148
      %p151 = scmp.ne.s32.totalorder %s136, %s150
      %p152 = scmp.eq.s32.totalorder %s21, 0
      %p153 = por %p151, %p152
      %s155 = sadd.s32 %s154, 1
      %p158 = scmp.eq.s32.totalorder %s15, 1
      %p159 = scmp.ne.s32.totalorder %s154, %s156
      %p160 = scmp.eq.s32.totalorder %s15, 0
      %p161 = por %p159, %p160
      %p162 = scmp.ne.s32.totalorder %s154, %s156
      %p163 = scmp.eq.s32.totalorder %s20, 1
      %p164 = por %p162, %p163
      %p165 = scmp.ne.s32.totalorder %s156, %s157
      %p166 = scmp.eq.s32.totalorder %s20, 0
      %p167 = por %p165, %p166
      %p168 = scmp.ne.s32.totalorder %s156, %s157
      %p169 = scmp.eq.s32.totalorder %s21, 1
      %p170 = por %p168, %p169
      %p172 = scmp.ne.s32.totalorder %s157, %s171
      %p173 = scmp.eq.s32.totalorder %s21, 0
      %p174 = por %p172, %p173
      %p175 = scmp.le.s32.totalorder 1, %s15
      %p176 = scmp.lt.s32.totalorder %s15, 3
      %p177 = pnand %p175, %p176
      %p178 = pneg %p177
      // Predicated region
      $region9: #{tpu_custom_call.1} parent=5 // pred_check
        _
      $region10: #{tpu_custom_call.1} parent=5 // pred_check_branch
        %180 = sbr.rel (%p177) target = $region12
      $region11: #{tpu_custom_call.1} parent=5 // pred_region
        %s181 = ssub.s32 %s15, 1
        // Predicated region
        $region13: #{tpu_custom_call.1} parent=11 // pred_check
          %p182 = pneg %p62
        $region14: #{tpu_custom_call.1} parent=11 // pred_check_branch
          %184 = sbr.rel (%p182) target = $region16
        $region15: #{tpu_custom_call.1} parent=11 // pred_region
          _
        $region16: #{tpu_custom_call.1} parent=11 // pred_fallthru
          _
        // Predicated region
        $region17: #{tpu_custom_call.1} parent=11 // pred_check
          %p185 = pneg %p83
        $region18: #{tpu_custom_call.1} parent=11 // pred_check_branch
          %187 = sbr.rel (%p185) target = $region20
        $region19: #{tpu_custom_call.1} parent=11 // pred_region
          _
        $region20: #{tpu_custom_call.1} parent=11 // pred_fallthru
          _
        // Predicated region
        $region21: #{tpu_custom_call.1} parent=11 // pred_check
          %p188 = pneg %p104
        $region22: #{tpu_custom_call.1} parent=11 // pred_check_branch
          %190 = sbr.rel (%p188) target = $region24
        $region23: #{tpu_custom_call.1} parent=11 // pred_region
          _
        $region24: #{tpu_custom_call.1} parent=11 // pred_fallthru
          _
        // Predicated region
        $region25: #{tpu_custom_call.1} parent=11 // pred_check
          %p191 = pneg %p125
        $region26: #{tpu_custom_call.1} parent=11 // pred_check_branch
          %193 = sbr.rel (%p191) target = $region28
        $region27: #{tpu_custom_call.1} parent=11 // pred_region
          _
        $region28: #{tpu_custom_call.1} parent=11 // pred_fallthru
          _
        // Predicated region
        $region29: #{tpu_custom_call.1} parent=11 // pred_check
          %p194 = pneg %p146
        $region30: #{tpu_custom_call.1} parent=11 // pred_check_branch
          %196 = sbr.rel (%p194) target = $region32
        $region31: #{tpu_custom_call.1} parent=11 // pred_region
          _
        $region32: #{tpu_custom_call.1} parent=11 // pred_fallthru
          _
      $region12: #{tpu_custom_call.1} parent=5 // pred_fallthru
        _
      %p197 = scmp.lt.s32.totalorder %s15, 2
      // Predicated region
      $region33: #{tpu_custom_call.1} parent=5 // pred_check
        %p198 = pneg %p197
      $region34: #{tpu_custom_call.1} parent=5 // pred_check_branch
        %200 = sbr.rel (%p198) target = $region36
      $region35: #{tpu_custom_call.1} parent=5 // pred_region
        // Predicated region
        $region37: #{tpu_custom_call.1} parent=35 // pred_check
          %p201 = pneg %p35
        $region38: #{tpu_custom_call.1} parent=35 // pred_check_branch
          %203 = sbr.rel (%p201) target = $region40
        $region39: #{tpu_custom_call.1} parent=35 // pred_region
          %s204 = sand.u32 %s25, 1
          %s205 = scalar_lea.sflag [#allocation5], %s204
          %s206 = sand.u32 %s25, 1
          %s207 = smul.addr %s206, 16
          %s208 = scalar_lea.vmem [#allocation4], %s207
          %s209 = smul.u32 4, %s15
          %211 = vsyncadd %s205, 0
          %s212 = smul.addr %s209, 4
          %s213 = scalar_lea.hbm %s0, %s212
          %s214 = sshll.u32 %s213, 4
          %s215 = int_to_ptr.hbm [resolvable:$true] %s214
          %s216 = sshll.u32 %s208, 4
          %s217 = int_to_ptr.vmem [resolvable:$true] %s216
          %222 = dma.hbm_to_vmem [thread:$0]  %s215, 256, %s217, %s205, 64, 64, 4
        $region40: #{tpu_custom_call.1} parent=35 // pred_fallthru
          _
      $region36: #{tpu_custom_call.1} parent=5 // pred_fallthru
        _
      %p223 = scmp.le.s32.totalorder 1, %s15
      %p224 = scmp.lt.s32.totalorder %s15, 3
      %p225 = pnand %p223, %p224
      %p226 = pneg %p225
      // Predicated region
      $region41: #{tpu_custom_call.1} parent=5 // pred_check
        _
      $region42: #{tpu_custom_call.1} parent=5 // pred_check_branch
        %228 = sbr.rel (%p225) target = $region44
      $region43: #{tpu_custom_call.1} parent=5 // pred_region
        %s229 = ssub.s32 %s15, 1
        %s230 = sand.u32 %s28, 1
        %s231 = scalar_lea.sflag [#allocation5], %s230
        %s232 = sand.u32 %s28, 1
        %s233 = smul.addr %s232, 16
        %s234 = scalar_lea.vmem [#allocation4], %s233
        // Predicated region
        $region45: #{tpu_custom_call.1} parent=43 // pred_check
          %p235 = pneg %p41
        $region46: #{tpu_custom_call.1} parent=43 // pred_check_branch
          %237 = sbr.rel (%p235) target = $region48
        $region47: #{tpu_custom_call.1} parent=43 // pred_region
          %239 = dma.done %s231, 256
        $region48: #{tpu_custom_call.1} parent=43 // pred_fallthru
          _
        %s240 = sand.u32 %s28, 1
        %s241 = scalar_lea.sflag [#allocation5], %s240
        %s242 = sand.u32 %s28, 1
        %s243 = smul.addr %s242, 16
        %s244 = scalar_lea.vmem [#allocation4], %s243
        %p245 = pneg %p41
        %p246 = pneg %p38
        %p247 = pneg %p62
        %p248 = pneg %p59
        %p249 = pneg %p83
        %p250 = pneg %p80
        %p251 = pneg %p104
        %p252 = pneg %p101
        %p253 = pneg %p125
        %p254 = pneg %p122
        %p255 = pneg %p146
        %p256 = pneg %p143
        %p257 = pneg %p167
        %p258 = pneg %p164
        %s259 = smul.u32 4, %s20
        %p261 = scmp.eq.s32.totalorder %s20, 0
        // Predicated region
        $region49: #{tpu_custom_call.1} parent=43 // pred_check
          %p262 = pneg %p261
        $region50: #{tpu_custom_call.1} parent=43 // pred_check_branch
          %264 = sbr.rel (%p262) target = $region52
        $region51: #{tpu_custom_call.1} parent=43 // pred_region
          %vm265 = vcmask 261120
          %266 = vst.msk [vmem:[#allocation2] sm:$0xff] %vm265, 0.0
          %267 = vst.msk [vmem:[#allocation3] sm:$0xff] %vm265, 0.0
        $region52: #{tpu_custom_call.1} parent=43 // pred_fallthru
          _
        %v268 = vld [vmem:[%s1] sm:$0xf]
        %v269 = vld [vmem:[%s1 + $0x4] sm:$0xf]
        %v270 = vld [vmem:[%s1 + $0x8] sm:$0xf]
        %v271 = vld [vmem:[%s1 + $0xc] sm:$0xf]
        %v272 = vld [vmem:[#allocation2] sm:$0xff]
        %v273 = vld [vmem:[#allocation3] sm:$0xff]
        %v274 = vld [vmem:[%s234] sm:$0xf]
        %v275 = vunpack.c.l.bf16 %v274
        %v276 = vpack.c.bf16 %v272, %v272
        %v281 = vunpack.c.l.b16 %v268
        %v282 = vunpack.c.l.b16 %v269
        %v283 = vunpack.c.l.b16 %v270
        %v284 = vunpack.c.l.b16 %v271
        %v285 = vpack.c.b16 %v282, %v281
        %v286 = vpack.c.b16 %v284, %v283
        %vm289 = vcmask 261120
        %v291 = vsel %vm289, %v276, 0
        %293 = vmatpush.bf16.msra.mxu0 0
        %294 = vmatpush.bf16.msra.mxu0 0
        %295 = vmatpush.bf16.msra.mxu0 0
        %296 = vmatpush.bf16.msra.mxu0 0
        %297 = vmatpush.bf16.msra.mxu0 0
        %298 = vmatpush.bf16.msra.mxu0 0
        %299 = vmatpush.bf16.msra.mxu0 %v286
        %300 = vmatpush.bf16.msra.mxu0 %v285
        %301 = vmatmul.bf16.gmra.mxu0 %v291
        %v302 = vpop.f32.mrf.mxu0
        %v303 = vadd.f32 0.0, %v302
        %v304 = vpop.f32.mrf.mxu0
        %305 = vdwg.mxu0
        %v306 = vadd.f32 %v275, %v303
        %v307 = vsub.f32 0.0, %v306
        %v308 = vmul.f32 %v307, 1.442695
        %v309 = vpow.pop %v308
        %v310 = vadd.f32 %v309, 1.0
        %v311 = vrcp.pop %v310
        %v312 = vtanh.pop %v306
        %314 = vrot.lane.b32.xlu0 %v273, 32
        %v315 = vpop.permute.xlu0 %314
        %v317 = vmul.f32 %v311, %v315
        %319 = vrot.lane.b32.xlu0 %v312, 32
        %v320 = vpop.permute.xlu0 %319
        %v322 = vmul.f32 %v311, %v320
        %324 = vrot.lane.b32.xlu0 %v322, 32
        %v325 = vpop.permute.xlu0 %324
        %v327 = vadd.f32 %v317, %v325
        %v328 = vtanh.pop %v327
        %330 = vrot.lane.b32.xlu0 %v328, 32
        %v331 = vpop.permute.xlu0 %330
        %v333 = vmul.f32 %v311, %v331
        %s334 = scalar_lea.vmem %s234, 4 [#allocation4]
        %v335 = vld [vmem:[%s334] sm:$0xf]
        %v336 = vunpack.c.l.bf16 %v335
        %v337 = vpack.c.bf16 %v333, %v333
        %339 = vrot.lane.b32.xlu0 %v337, 64
        %v340 = vpop.permute.xlu0 %339
        %v342 = vsel %vm289, %v340, 0
        %344 = vmatpush.bf16.msra.mxu0 0
        %345 = vmatpush.bf16.msra.mxu0 0
        %346 = vmatpush.bf16.msra.mxu0 0
        %347 = vmatpush.bf16.msra.mxu0 0
        %348 = vmatpush.bf16.msra.mxu0 0
        %349 = vmatpush.bf16.msra.mxu0 0
        %350 = vmatpush.bf16.msra.mxu0 %v286
        %351 = vmatpush.bf16.msra.mxu0 %v285
        %352 = vmatmul.bf16.gmra.mxu0 %v342
        %v353 = vpop.f32.mrf.mxu0
        %v354 = vadd.f32 0.0, %v353
        %v355 = vpop.f32.mrf.mxu0
        %356 = vdwg.mxu0
        %v357 = vadd.f32 %v336, %v354
        %v358 = vsub.f32 0.0, %v357
        %v359 = vmul.f32 %v358, 1.442695
        %v360 = vpow.pop %v359
        %v361 = vadd.f32 %v360, 1.0
        %v362 = vrcp.pop %v361
        %v363 = vtanh.pop %v357
        %v364 = vmul.f32 %v362, %v327
        %366 = vrot.lane.b32.xlu0 %v363, 32
        %v367 = vpop.permute.xlu0 %366
        %v369 = vmul.f32 %v362, %v367
        %371 = vrot.lane.b32.xlu0 %v369, 32
        %v372 = vpop.permute.xlu0 %371
        %v374 = vadd.f32 %v364, %v372
        %v375 = vtanh.pop %v374
        %377 = vrot.lane.b32.xlu0 %v375, 32
        %v378 = vpop.permute.xlu0 %377
        %v380 = vmul.f32 %v362, %v378
        %s381 = scalar_lea.vmem %s234, 8 [#allocation4]
        %v382 = vld [vmem:[%s381] sm:$0xf]
        %v383 = vunpack.c.l.bf16 %v382
        %v384 = vpack.c.bf16 %v380, %v380
        %386 = vrot.lane.b32.xlu0 %v384, 64
        %v387 = vpop.permute.xlu0 %386
        %v389 = vsel %vm289, %v387, 0
        %391 = vmatpush.bf16.msra.mxu0 0
        %392 = vmatpush.bf16.msra.mxu0 0
        %393 = vmatpush.bf16.msra.mxu0 0
        %394 = vmatpush.bf16.msra.mxu0 0
        %395 = vmatpush.bf16.msra.mxu0 0
        %396 = vmatpush.bf16.msra.mxu0 0
        %397 = vmatpush.bf16.msra.mxu0 %v286
        %398 = vmatpush.bf16.msra.mxu0 %v285
        %399 = vmatmul.bf16.gmra.mxu0 %v389
        %v400 = vpop.f32.mrf.mxu0
        %v401 = vadd.f32 0.0, %v400
        %v402 = vpop.f32.mrf.mxu0
        %403 = vdwg.mxu0
        %v404 = vadd.f32 %v383, %v401
        %v405 = vsub.f32 0.0, %v404
        %v406 = vmul.f32 %v405, 1.442695
        %v407 = vpow.pop %v406
        %v408 = vadd.f32 %v407, 1.0
        %v409 = vrcp.pop %v408
        %v410 = vtanh.pop %v404
        %v411 = vmul.f32 %v409, %v374
        %413 = vrot.lane.b32.xlu0 %v410, 32
        %v414 = vpop.permute.xlu0 %413
        %v416 = vmul.f32 %v409, %v414
        %418 = vrot.lane.b32.xlu0 %v416, 32
        %v419 = vpop.permute.xlu0 %418
        %v421 = vadd.f32 %v411, %v419
        %v422 = vtanh.pop %v421
        %424 = vrot.lane.b32.xlu0 %v422, 32
        %v425 = vpop.permute.xlu0 %424
        %v427 = vmul.f32 %v409, %v425
        %s428 = scalar_lea.vmem %s234, 12 [#allocation4]
        %v429 = vld [vmem:[%s428] sm:$0xf]
        %v430 = vunpack.c.l.bf16 %v429
        %v431 = vpack.c.bf16 %v427, %v427
        %433 = vrot.lane.b32.xlu0 %v431, 64
        %v434 = vpop.permute.xlu0 %433
        %v436 = vsel %vm289, %v434, 0
        %438 = vmatpush.bf16.msra.mxu0 0
        %439 = vmatpush.bf16.msra.mxu0 0
        %440 = vmatpush.bf16.msra.mxu0 0
        %441 = vmatpush.bf16.msra.mxu0 0
        %442 = vmatpush.bf16.msra.mxu0 0
        %443 = vmatpush.bf16.msra.mxu0 0
        %444 = vmatpush.bf16.msra.mxu0 %v286
        %445 = vmatpush.bf16.msra.mxu0 %v285
        %446 = vmatmul.bf16.gmra.mxu0 %v436
        %v447 = vpop.f32.mrf.mxu0
        %v448 = vadd.f32 0.0, %v447
        %v449 = vpop.f32.mrf.mxu0
        %450 = vdwg.mxu0
        %v451 = vadd.f32 %v430, %v448
        %v452 = vsub.f32 0.0, %v451
        %v453 = vmul.f32 %v452, 1.442695
        %v454 = vpow.pop %v453
        %v455 = vadd.f32 %v454, 1.0
        %v456 = vrcp.pop %v455
        %v457 = vtanh.pop %v451
        %v458 = vmul.f32 %v456, %v421
        %460 = vrot.lane.b32.xlu0 %v457, 32
        %v461 = vpop.permute.xlu0 %460
        %v463 = vmul.f32 %v456, %v461
        %465 = vrot.lane.b32.xlu0 %v463, 32
        %v466 = vpop.permute.xlu0 %465
        %v468 = vadd.f32 %v458, %v466
        %v469 = vtanh.pop %v468
        %471 = vrot.lane.b32.xlu0 %v469, 32
        %v472 = vpop.permute.xlu0 %471
        %v474 = vmul.f32 %v456, %v472
        %476 = vrot.lane.b32.xlu0 %v474, 64
        %v477 = vpop.permute.xlu0 %476
        %479 = vst.msk [vmem:[#allocation2] sm:$0xff] %vm289, %v477
        %481 = vrot.lane.b32.xlu0 %v468, 96
        %v482 = vpop.permute.xlu0 %481
        %484 = vst.msk [vmem:[#allocation3] sm:$0xff] %vm289, %v482
        %p485 = scmp.eq.s32.totalorder %s20, 1
        // Predicated region
        $region53: #{tpu_custom_call.1} parent=43 // pred_check
          %p486 = pneg %p485
        $region54: #{tpu_custom_call.1} parent=43 // pred_check_branch
          %488 = sbr.rel (%p486) target = $region56
        $region55: #{tpu_custom_call.1} parent=43 // pred_region
          %v489 = vpack.c.bf16 %v474, %v474
          %v490 = vld [vmem:[%s3] sm:$0xf]
          %v491 = vld [vmem:[%s3 + $0x4] sm:$0xf]
          %v492 = vld [vmem:[%s3 + $0x8] sm:$0xf]
          %v493 = vld [vmem:[%s3 + $0xc] sm:$0xf]
          %v494 = vld [vmem:[%s2] sm:$0xf]
          %v495 = vld [vmem:[%s4] sm:$0xf]
          %vm496 = vcmask 64512
          %v498 = vsel %vm496, %v494, 0
          %vm500 = vcmask 1043456
          %v502 = vsel %vm500, %v495, 0
          %504 = vmatpush.bf16.msra.mxu0 0
          %505 = vmatpush.bf16.msra.mxu0 0
          %506 = vmatpush.bf16.msra.mxu0 0
          %507 = vmatpush.bf16.msra.mxu0 0
          %508 = vmatpush.bf16.msra.mxu0 0
          %509 = vmatpush.bf16.msra.mxu0 0
          %510 = vmatpush.bf16.msra.mxu0 0
          %511 = vmatpush.bf16.msra.mxu0 %v502
          %512 = vmatmul.bf16.gmra.mxu0 %v498
          %v513 = vpop.f32.mrf.mxu0
          %v514 = vadd.f32 0.0, %v513
          %v515 = vpop.f32.mrf.mxu0
          %516 = vdwg.mxu0
          %518 = vrot.lane.b32.xlu0 %v489, 64
          %v519 = vpop.permute.xlu0 %518
          %v524 = vunpack.c.l.b16 %v490
          %v525 = vunpack.c.l.b16 %v491
          %v526 = vunpack.c.l.b16 %v492
          %v527 = vunpack.c.l.b16 %v493
          %v528 = vpack.c.b16 %v525, %v524
          %v529 = vpack.c.b16 %v527, %v526
          %v533 = vsel %vm289, %v519, 0
          %535 = vmatpush.bf16.msra.mxu0 0
          %536 = vmatpush.bf16.msra.mxu0 0
          %537 = vmatpush.bf16.msra.mxu0 0
          %538 = vmatpush.bf16.msra.mxu0 0
          %539 = vmatpush.bf16.msra.mxu0 0
          %540 = vmatpush.bf16.msra.mxu0 0
          %541 = vmatpush.bf16.msra.mxu0 %v529
          %542 = vmatpush.bf16.msra.mxu0 %v528
          %543 = vmatmul.bf16.gmra.mxu0 %v533
          %v544 = vpop.f32.mrf.mxu0
          %v545 = vadd.f32 %v514, %v544
          %v546 = vpop.f32.mrf.mxu0
          %547 = vdwg.mxu0
          %v548 = vld [vmem:[%s5] sm:$0x1]
          %v550 = vperm.slane %v548, 0
          %v552 = vadd.f32 %v545, %v550
          %vm553 = vcmask 31744
          %554 = vst.msk [vmem:[%s6] sm:$0xff] %vm553, %v552
        $region56: #{tpu_custom_call.1} parent=43 // pred_fallthru
          _
        // Predicated region
        $region57: #{tpu_custom_call.1} parent=43 // pred_check
          %p555 = pneg %p164
        $region58: #{tpu_custom_call.1} parent=43 // pred_check_branch
          %557 = sbr.rel (%p555) target = $region60
        $region59: #{tpu_custom_call.1} parent=43 // pred_region
          _
        $region60: #{tpu_custom_call.1} parent=43 // pred_fallthru
          _
        // Predicated region
        $region61: #{tpu_custom_call.1} parent=43 // pred_check
          %p558 = pneg %p164
        $region62: #{tpu_custom_call.1} parent=43 // pred_check_branch
          %560 = sbr.rel (%p558) target = $region64
        $region63: #{tpu_custom_call.1} parent=43 // pred_region
          _
        $region64: #{tpu_custom_call.1} parent=43 // pred_fallthru
          _
      $region44: #{tpu_custom_call.1} parent=5 // pred_fallthru
        _
      %p561 = scmp.le.s32.totalorder 2, %s15
      // Predicated region
      $region65: #{tpu_custom_call.1} parent=5 // pred_check
        %p562 = pneg %p561
      $region66: #{tpu_custom_call.1} parent=5 // pred_check_branch
        %564 = sbr.rel (%p562) target = $region68
      $region67: #{tpu_custom_call.1} parent=5 // pred_region
        %s565 = ssub.s32 %s15, 2
      $region68: #{tpu_custom_call.1} parent=5 // pred_fallthru
        _
    $region6: #{tpu_custom_call.1} parent=1 // loop_footer
      %s19 = sadd.s32 1, %s15
    $region7: #{tpu_custom_call.1} parent=1 // loop_footer_branch
      %14 = sbr.rel target = $region3
    $region8: #{tpu_custom_call.1} parent=1 // loop_exit
      _
    %566 = vsyncpa [#allocation5], 1
    %s567 = scalar_lea.sflag [#allocation5], 1
    %568 = vsyncpa %s567, 1

</llo_original>
